<compile_context>
chip_gen: v7x
topology: tpu7x:2x2x1
jax: 0.10.0
libtpu: 0.0.40
codegen_flags: <defaults>
</compile_context>

<pallas_src>
import jax
import jax.numpy as jnp
import numpy as np
from jax.experimental import pallas as pl
from jax.experimental.pallas import tpu as pltpu


def _round_up(x, m):
    return ((x + m - 1) // m) * m


def encoder_kernel(x_ref, w1_ref, b1_ref, w2_ref, b2_ref, w3_ref, b3_ref, o_ref):
    x = x_ref[...]                                    # (TB, F) batch-major tile

    # Linear(num_dim, 128) + ReLU, feature-major: (H, F) . (TB, F)^T -> (H, TB)
    h1 = jax.lax.dot_general(
        w1_ref[...], x,
        dimension_numbers=(((1,), (1,)), ((), ())),
        preferred_element_type=jnp.float32,
    ) + b1_ref[...]                                   # (H, TB) + (H, 1)
    h1 = jnp.maximum(h1, 0.0)

    # Linear(128, num_classes) + Sigmoid: (C, H) @ (H, TB) -> (C, TB)
    h2 = jnp.dot(w2_ref[...], h1, preferred_element_type=jnp.float32) + b2_ref[...]
    h2 = jax.nn.sigmoid(h2)                           # (C, TB)

    # Linear(num_classes, 1) + Sigmoid: N=1 matmul replaced by a VPU multiply
    # + cross-sublane reduce; result is already lane-dense (1, TB).
    h3 = jnp.sum(h2 * w3_ref[...], axis=0, keepdims=True) + b3_ref[...]   # (1, TB)
    o_ref[...] = jax.nn.sigmoid(h3).astype(o_ref.dtype)


def encoder_forward(x, params, block_rows=1024):
    """x: [B, num_dim] float32. Returns [B, 1] float32."""
    w1, b1, w2, b2, w3, b3 = params                   # PyTorch layout (out, in) / (out,)
    B, F = x.shape
    H = w1.shape[0]
    C = w2.shape[0]

    # Batch tile: multiple of 128 so the (1, TB) output block is lane-dense.
    TB = _round_up(min(block_rows, _round_up(B, 128)), 128)
    B_pad = _round_up(B, TB)
    if B_pad != B:
        x = jnp.pad(x, ((0, B_pad - B), (0, 0)))
    num_tiles = B_pad // TB

    b1c = b1.reshape(H, 1)
    b2c = b2.reshape(C, 1)
    w3c = w3.reshape(C, 1)        # (1, C) row -> (C, 1) column
    b3c = b3.reshape(1, 1)

    out = pl.pallas_call(
        encoder_kernel,
        out_shape=jax.ShapeDtypeStruct((1, B_pad), jnp.float32),
        grid=(num_tiles,),
        in_specs=[
            pl.BlockSpec((TB, F), lambda i: (i, 0)),      # x tile, streamed
            pl.BlockSpec((H, F), lambda i: (0, 0)),       # W1, VMEM-resident
            pl.BlockSpec((H, 1), lambda i: (0, 0)),       # b1
            pl.BlockSpec((C, H), lambda i: (0, 0)),       # W2
            pl.BlockSpec((C, 1), lambda i: (0, 0)),       # b2
            pl.BlockSpec((C, 1), lambda i: (0, 0)),       # W3 (column)
            pl.BlockSpec((1, 1), lambda i: (0, 0)),       # b3
        ],
        out_specs=pl.BlockSpec((1, TB), lambda i: (0, i)),  # lane-dense output
        compiler_params=pltpu.CompilerParams(
            dimension_semantics=("parallel",),
            vmem_limit_bytes=32 << 20,
        ),
    )(x, w1, b1c, w2, b2c, w3c, b3c)

    return out.reshape(B_pad, 1)[:B]


def init_params(key, num_dim, num_classes, hidden=128):
    """PyTorch-style default nn.Linear init, weights kept as (out, in)."""
    def linear(k, fan_in, fan_out):
        kw, kb = jax.random.split(k)
        bound = 1.0 / np.sqrt(fan_in)
        w = jax.random.uniform(kw, (fan_out, fan_in), jnp.float32, -bound, bound)
        b = jax.random.uniform(kb, (fan_out,), jnp.float32, -bound, bound)
        return w, b

    k1, k2, k3 = jax.random.split(key, 3)
    w1, b1 = linear(k1, num_dim, hidden)
    w2, b2 = linear(k2, hidden, num_classes)
    w3, b3 = linear(k3, num_classes, 1)
    return (w1, b1, w2, b2, w3, b3)


def reference_forward(x, params):
    """Plain-JAX reference of the PyTorch forward for a correctness check."""
    w1, b1, w2, b2, w3, b3 = params
    h = jnp.maximum(x @ w1.T + b1, 0.0)
    h = jax.nn.sigmoid(h @ w2.T + b2)
    return jax.nn.sigmoid(h @ w3.T + b3)


if __name__ == "__main__":
    # Module was constructed as Encoder(num_dims=(4, 4), num_classes=8):
    # num_dim = prod((4, 4)) = 16 input features.
    num_dims = (4, 4)
    num_classes = 8
    num_dim = int(np.prod(num_dims))

    key = jax.random.PRNGKey(0)
    kx1, kx2, kp = jax.random.split(key, 3)
    params = init_params(kp, num_dim, num_classes)

    # Small demo batch (single tile, padded up to 128 rows).
    x1 = jax.random.normal(kx1, (8, num_dim), dtype=jnp.float32)
    out1 = jax.block_until_ready(encoder_forward(x1, params))
    ref1 = reference_forward(x1, params)
    np.testing.assert_allclose(np.asarray(out1), np.asarray(ref1), rtol=1e-5, atol=1e-5)
    assert out1.shape == (8, 1)

    # Multi-tile + tail-padding check: 300 rows with 128-row tiles -> 3 grid steps.
    x2 = jax.random.normal(kx2, (300, num_dim), dtype=jnp.float32)
    out2 = jax.block_until_ready(encoder_forward(x2, params, block_rows=128))
    ref2 = reference_forward(x2, params)
    np.testing.assert_allclose(np.asarray(out2), np.asarray(ref2), rtol=1e-5, atol=1e-5)
    assert out2.shape == (300, 1)

    print("KERNEL_OK")
</pallas_src>

<mosaic_0001>
module attributes {stable_mosaic.version = 11 : i64} {
  func.func @encoder_kernel(%arg0: i32, %arg1: memref<128x16xf32, #tpu.memory_space<vmem>>, %arg2: memref<128x16xf32, #tpu.memory_space<vmem>>, %arg3: memref<128x1xf32, #tpu.memory_space<vmem>>, %arg4: memref<8x128xf32, #tpu.memory_space<vmem>>, %arg5: memref<8x1xf32, #tpu.memory_space<vmem>>, %arg6: memref<8x1xf32, #tpu.memory_space<vmem>>, %arg7: memref<1x1xf32, #tpu.memory_space<vmem>>, %arg8: memref<1x128xf32, #tpu.memory_space<vmem>>) attributes {dimension_semantics = [#tpu.dimension_semantics<parallel>], iteration_bounds = array<i64: 1>, scalar_prefetch = 0 : i64, scratch_operands = 0 : i64, tpu.core_type = #tpu.core_type<tc>, window_params = [{transform_indices = @transform_0, window_bounds = array<i64: 128, 16>}, {pipeline_mode = #tpu.pipeline_mode<synchronous>, transform_indices = @transform_1, window_bounds = array<i64: 128, 16>}, {pipeline_mode = #tpu.pipeline_mode<synchronous>, transform_indices = @transform_2, window_bounds = array<i64: 128, 1>}, {pipeline_mode = #tpu.pipeline_mode<synchronous>, transform_indices = @transform_3, window_bounds = array<i64: 8, 128>}, {pipeline_mode = #tpu.pipeline_mode<synchronous>, transform_indices = @transform_4, window_bounds = array<i64: 8, 1>}, {pipeline_mode = #tpu.pipeline_mode<synchronous>, transform_indices = @transform_5, window_bounds = array<i64: 8, 1>}, {pipeline_mode = #tpu.pipeline_mode<synchronous>, transform_indices = @transform_6, window_bounds = array<i64: 1, 1>}, {transform_indices = @transform_7, window_bounds = array<i64: 1, 128>}]} {
    %c0 = arith.constant 0 : index
    %c0_0 = arith.constant 0 : index
    %0 = vector.load %arg1[%c0, %c0_0] : memref<128x16xf32, #tpu.memory_space<vmem>>, vector<128x16xf32>
    %c0_1 = arith.constant 0 : index
    %c0_2 = arith.constant 0 : index
    %1 = vector.load %arg2[%c0_1, %c0_2] : memref<128x16xf32, #tpu.memory_space<vmem>>, vector<128x16xf32>
    %cst = arith.constant dense<0.000000e+00> : vector<128x128xf32>
    %2 = tpu.matmul %1, %0, %cst {dimension_numbers = #tpu.dot_dimension_numbers<[1], [1], [0], [0], [0, 0, 1, 0], [], []>} : vector<128x16xf32>, vector<128x16xf32>, vector<128x128xf32> -> vector<128x128xf32>
    %c0_3 = arith.constant 0 : index
    %c0_4 = arith.constant 0 : index
    %3 = vector.load %arg3[%c0_3, %c0_4] : memref<128x1xf32, #tpu.memory_space<vmem>>, vector<128x1xf32>
    %4 = vector.broadcast %3 : vector<128x1xf32> to vector<128x128xf32>
    %5 = arith.addf %2, %4 : vector<128x128xf32>
    %cst_5 = arith.constant 0.000000e+00 : f32
    %6 = vector.broadcast %cst_5 : f32 to vector<128x128xf32>
    %7 = arith.maximumf %5, %6 : vector<128x128xf32>
    %c0_6 = arith.constant 0 : index
    %c0_7 = arith.constant 0 : index
    %8 = vector.load %arg4[%c0_6, %c0_7] : memref<8x128xf32, #tpu.memory_space<vmem>>, vector<8x128xf32>
    %cst_8 = arith.constant dense<0.000000e+00> : vector<8x128xf32>
    %9 = tpu.matmul %8, %7, %cst_8 {dimension_numbers = #tpu.dot_dimension_numbers<[1], [0], [0], [1], [0, 0, 1, 1], [], []>} : vector<8x128xf32>, vector<128x128xf32>, vector<8x128xf32> -> vector<8x128xf32>
    %c0_9 = arith.constant 0 : index
    %c0_10 = arith.constant 0 : index
    %10 = vector.load %arg5[%c0_9, %c0_10] : memref<8x1xf32, #tpu.memory_space<vmem>>, vector<8x1xf32>
    %11 = vector.broadcast %10 : vector<8x1xf32> to vector<8x128xf32>
    %12 = arith.addf %9, %11 : vector<8x128xf32>
    %13 = arith.negf %12 : vector<8x128xf32>
    %14 = math.exp %13 : vector<8x128xf32>
    %cst_11 = arith.constant 1.000000e+00 : f32
    %15 = vector.broadcast %cst_11 : f32 to vector<8x128xf32>
    %16 = arith.addf %15, %14 : vector<8x128xf32>
    %17 = arith.divf %15, %16 : vector<8x128xf32>
    %c0_12 = arith.constant 0 : index
    %c0_13 = arith.constant 0 : index
    %18 = vector.load %arg6[%c0_12, %c0_13] : memref<8x1xf32, #tpu.memory_space<vmem>>, vector<8x1xf32>
    %19 = vector.broadcast %18 : vector<8x1xf32> to vector<8x128xf32>
    %20 = arith.mulf %17, %19 : vector<8x128xf32>
    %cst_14 = arith.constant dense<0.000000e+00> : vector<128xf32>
    %21 = vector.multi_reduction <add>, %20, %cst_14 [0] : vector<8x128xf32> to vector<128xf32>
    %22 = vector.shape_cast %21 : vector<128xf32> to vector<1x128xf32>
    %c0_15 = arith.constant 0 : index
    %c0_16 = arith.constant 0 : index
    %23 = vector.load %arg7[%c0_15, %c0_16] : memref<1x1xf32, #tpu.memory_space<vmem>>, vector<1x1xf32>
    %24 = vector.broadcast %23 : vector<1x1xf32> to vector<1x128xf32>
    %25 = arith.addf %22, %24 : vector<1x128xf32>
    %26 = arith.negf %25 : vector<1x128xf32>
    %27 = math.exp %26 : vector<1x128xf32>
    %cst_17 = arith.constant 1.000000e+00 : f32
    %28 = vector.broadcast %cst_17 : f32 to vector<1x128xf32>
    %29 = arith.addf %28, %27 : vector<1x128xf32>
    %30 = arith.divf %28, %29 : vector<1x128xf32>
    %c0_18 = arith.constant 0 : index
    %c0_19 = arith.constant 0 : index
    %31 = vector.load %arg8[%c0_18, %c0_19] : memref<1x128xf32, #tpu.memory_space<vmem>>, vector<1x128xf32>
    tpu.vector_store %arg8[%c0_18, %c0_19], %30 {strides = array<i32>} : memref<1x128xf32, #tpu.memory_space<vmem>>, vector<1x128xf32>,
    return
  }
  func.func @transform_0(%arg0: i32) -> (i32, i32) {
    %c0_i32 = arith.constant 0 : i32
    %c0_i32_0 = arith.constant 0 : i32
    return %arg0, %c0_i32 : i32, i32
  }
  func.func @transform_1(%arg0: i32) -> (i32, i32) {
    %c0_i32 = arith.constant 0 : i32
    %c0_i32_0 = arith.constant 0 : i32
    %c0_i32_1 = arith.constant 0 : i32
    return %c0_i32, %c0_i32_0 : i32, i32
  }
  func.func @transform_2(%arg0: i32) -> (i32, i32) {
    %c0_i32 = arith.constant 0 : i32
    %c0_i32_0 = arith.constant 0 : i32
    %c0_i32_1 = arith.constant 0 : i32
    return %c0_i32, %c0_i32_0 : i32, i32
  }
  func.func @transform_3(%arg0: i32) -> (i32, i32) {
    %c0_i32 = arith.constant 0 : i32
    %c0_i32_0 = arith.constant 0 : i32
    %c0_i32_1 = arith.constant 0 : i32
    return %c0_i32, %c0_i32_0 : i32, i32
  }
  func.func @transform_4(%arg0: i32) -> (i32, i32) {
    %c0_i32 = arith.constant 0 : i32
    %c0_i32_0 = arith.constant 0 : i32
    %c0_i32_1 = arith.constant 0 : i32
    return %c0_i32, %c0_i32_0 : i32, i32
  }
  func.func @transform_5(%arg0: i32) -> (i32, i32) {
    %c0_i32 = arith.constant 0 : i32
    %c0_i32_0 = arith.constant 0 : i32
    %c0_i32_1 = arith.constant 0 : i32
    return %c0_i32, %c0_i32_0 : i32, i32
  }
  func.func @transform_6(%arg0: i32) -> (i32, i32) {
    %c0_i32 = arith.constant 0 : i32
    %c0_i32_0 = arith.constant 0 : i32
    %c0_i32_1 = arith.constant 0 : i32
    return %c0_i32, %c0_i32_0 : i32, i32
  }
  func.func @transform_7(%arg0: i32) -> (i32, i32) {
    %c0_i32 = arith.constant 0 : i32
    %c0_i32_0 = arith.constant 0 : i32
    return %c0_i32, %arg0 : i32, i32
  }
}

</mosaic_0001>

<llo_original>
// kernel: tpu_custom_call.1
$region0: #{tpu_custom_call.1}
  #allocation0 [shape = 'u32[]', space=smem, size = 0x4, offset = 0x4, fixed_abs, tag = 'smem constant byte address 0x4 - core index']
  #allocation1 [shape = 'u32[144,128]{1,0:T(1,128)}', space=vmem, size = 0x12000, scoped, tag = 'internal scratch']
  #allocation2 [shape = 'f32[1,1]{1,0:T(1,128)S(1)}', space=vmem, size = 0x200, scoped, tag = 'scoped memory for tpu_custom_call.1']
  %s0 = inlined_call_operand.vmem [shape: f32[128,16], index: 0, kind: input, shape index: {}]
  %s1 = inlined_call_operand.vmem [shape: f32[128,16], index: 1, kind: input, shape index: {}]
  %s2 = inlined_call_operand.vmem [shape: f32[128,1], index: 2, kind: input, shape index: {}]
  %s3 = inlined_call_operand.vmem [shape: f32[8,128], index: 3, kind: input, shape index: {}]
  %s4 = inlined_call_operand.vmem [shape: f32[8,1], index: 4, kind: input, shape index: {}]
  %s5 = inlined_call_operand.vmem [shape: f32[8,1], index: 5, kind: input, shape index: {}]
  %s6 = inlined_call_operand.<no memory space> [shape: f32[1,1], index: 6, kind: input, shape index: {}]
  %s7 = inlined_call_operand.hbm [shape: f32[1,128], index: 7, kind: output, shape index: {}]
  %s8 = sld [smem:[#allocation0]]
  $region38: #{tpu_custom_call.1} parent=0
    _
  %s10 = ssub.s32 1, %s8
  %s11 = scalar_select 0, %s10, %s8
  %v12 = vstv %s6
  %13 = vst [vmem:[#allocation2] sm:$0x1] %v12
  $region1: #{tpu_custom_call.1} parent=0
    #allocation3 [shape = 'u8[512]{0}', space=vmem, size = 0x400, scoped, tag = 'output window, operand 0, single buffered']
    #allocation4 [shape = 's32[1]{0}', space=sflag, size = 0x4, scoped, tag = 'scoped memory for tpu_custom_call.1']
    %14 = vsyncpa [#allocation4], 0
    // Predicated region
    $region2: #{tpu_custom_call.1} parent=1 // pred_check
      _
    $region3: #{tpu_custom_call.1} parent=1 // pred_check_branch
      %16 = sbr.rel (0) target = $region5
    $region4: #{tpu_custom_call.1} parent=1 // pred_region
      _
    $region5: #{tpu_custom_call.1} parent=1 // pred_fallthru
      _
    // Predicated region
    $region6: #{tpu_custom_call.1} parent=1 // pred_check
      _
    $region7: #{tpu_custom_call.1} parent=1 // pred_check_branch
      %18 = sbr.rel (0) target = $region9
    $region8: #{tpu_custom_call.1} parent=1 // pred_region
      _
    $region9: #{tpu_custom_call.1} parent=1 // pred_fallthru
      _
    // Predicated region
    $region10: #{tpu_custom_call.1} parent=1 // pred_check
      _
    $region11: #{tpu_custom_call.1} parent=1 // pred_check_branch
      %20 = sbr.rel (0) target = $region13
    $region12: #{tpu_custom_call.1} parent=1 // pred_region
      _
    $region13: #{tpu_custom_call.1} parent=1 // pred_fallthru
      _
    // Predicated region
    $region14: #{tpu_custom_call.1} parent=1 // pred_check
      _
    $region15: #{tpu_custom_call.1} parent=1 // pred_check_branch
      %22 = sbr.rel (0) target = $region17
    $region16: #{tpu_custom_call.1} parent=1 // pred_region
      _
    $region17: #{tpu_custom_call.1} parent=1 // pred_fallthru
      _
    // Predicated region
    $region18: #{tpu_custom_call.1} parent=1 // pred_check
      _
    $region19: #{tpu_custom_call.1} parent=1 // pred_check_branch
      %24 = sbr.rel (0) target = $region21
    $region20: #{tpu_custom_call.1} parent=1 // pred_region
      _
    $region21: #{tpu_custom_call.1} parent=1 // pred_fallthru
      _
    // Predicated region
    $region22: #{tpu_custom_call.1} parent=1 // pred_check
      _
    $region23: #{tpu_custom_call.1} parent=1 // pred_check_branch
      %26 = sbr.rel (0) target = $region25
    $region24: #{tpu_custom_call.1} parent=1 // pred_region
      _
    $region25: #{tpu_custom_call.1} parent=1 // pred_fallthru
      _
    // Predicated region
    $region26: #{tpu_custom_call.1} parent=1 // pred_check
      _
    $region27: #{tpu_custom_call.1} parent=1 // pred_check_branch
      %28 = sbr.rel (0) target = $region29
    $region28: #{tpu_custom_call.1} parent=1 // pred_region
      _
    $region29: #{tpu_custom_call.1} parent=1 // pred_fallthru
      _
    %v29 = vld [vmem:[%s0] sm:$0xff]
    %v30 = vld [vmem:[%s0 + $0x8] sm:$0xff]
    %v31 = vld [vmem:[%s0 + $0x10] sm:$0xff]
    %v32 = vld [vmem:[%s0 + $0x18] sm:$0xff]
    %v33 = vld [vmem:[%s0 + $0x20] sm:$0xff]
    %v34 = vld [vmem:[%s0 + $0x28] sm:$0xff]
    %v35 = vld [vmem:[%s0 + $0x30] sm:$0xff]
    %v36 = vld [vmem:[%s0 + $0x38] sm:$0xff]
    %v37 = vld [vmem:[%s0 + $0x40] sm:$0xff]
    %v38 = vld [vmem:[%s0 + $0x48] sm:$0xff]
    %v39 = vld [vmem:[%s0 + $0x50] sm:$0xff]
    %v40 = vld [vmem:[%s0 + $0x58] sm:$0xff]
    %v41 = vld [vmem:[%s0 + $0x60] sm:$0xff]
    %v42 = vld [vmem:[%s0 + $0x68] sm:$0xff]
    %v43 = vld [vmem:[%s0 + $0x70] sm:$0xff]
    %v44 = vld [vmem:[%s0 + $0x78] sm:$0xff]
    %v45 = vld [vmem:[%s1] sm:$0xff]
    %v46 = vld [vmem:[%s1 + $0x8] sm:$0xff]
    %v47 = vld [vmem:[%s1 + $0x10] sm:$0xff]
    %v48 = vld [vmem:[%s1 + $0x18] sm:$0xff]
    %v49 = vld [vmem:[%s1 + $0x20] sm:$0xff]
    %v50 = vld [vmem:[%s1 + $0x28] sm:$0xff]
    %v51 = vld [vmem:[%s1 + $0x30] sm:$0xff]
    %v52 = vld [vmem:[%s1 + $0x38] sm:$0xff]
    %v53 = vld [vmem:[%s1 + $0x40] sm:$0xff]
    %v54 = vld [vmem:[%s1 + $0x48] sm:$0xff]
    %v55 = vld [vmem:[%s1 + $0x50] sm:$0xff]
    %v56 = vld [vmem:[%s1 + $0x58] sm:$0xff]
    %v57 = vld [vmem:[%s1 + $0x60] sm:$0xff]
    %v58 = vld [vmem:[%s1 + $0x68] sm:$0xff]
    %v59 = vld [vmem:[%s1 + $0x70] sm:$0xff]
    %v60 = vld [vmem:[%s1 + $0x78] sm:$0xff]
    %v61 = vld [vmem:[%s2] sm:$0xff]
    %v62 = vld [vmem:[%s2 + $0x8] sm:$0xff]
    %v63 = vld [vmem:[%s2 + $0x10] sm:$0xff]
    %v64 = vld [vmem:[%s2 + $0x18] sm:$0xff]
    %v65 = vld [vmem:[%s2 + $0x20] sm:$0xff]
    %v66 = vld [vmem:[%s2 + $0x28] sm:$0xff]
    %v67 = vld [vmem:[%s2 + $0x30] sm:$0xff]
    %v68 = vld [vmem:[%s2 + $0x38] sm:$0xff]
    %v69 = vld [vmem:[%s2 + $0x40] sm:$0xff]
    %v70 = vld [vmem:[%s2 + $0x48] sm:$0xff]
    %v71 = vld [vmem:[%s2 + $0x50] sm:$0xff]
    %v72 = vld [vmem:[%s2 + $0x58] sm:$0xff]
    %v73 = vld [vmem:[%s2 + $0x60] sm:$0xff]
    %v74 = vld [vmem:[%s2 + $0x68] sm:$0xff]
    %v75 = vld [vmem:[%s2 + $0x70] sm:$0xff]
    %v76 = vld [vmem:[%s2 + $0x78] sm:$0xff]
    %78 = vset.pattern.permute.xlu0 0
    %79 = vperm.xlu0 %78, %v61
    %v80 = vpop.permute.xlu0 %79
    %83 = vset.pattern.permute.xlu0 0
    %84 = vperm.xlu0 %83, %v62
    %v85 = vpop.permute.xlu0 %84
    %88 = vset.pattern.permute.xlu0 0
    %89 = vperm.xlu0 %88, %v63
    %v90 = vpop.permute.xlu0 %89
    %93 = vset.pattern.permute.xlu0 0
    %94 = vperm.xlu0 %93, %v64
    %v95 = vpop.permute.xlu0 %94
    %98 = vset.pattern.permute.xlu0 0
    %99 = vperm.xlu0 %98, %v65
    %v100 = vpop.permute.xlu0 %99
    %103 = vset.pattern.permute.xlu0 0
    %104 = vperm.xlu0 %103, %v66
    %v105 = vpop.permute.xlu0 %104
    %108 = vset.pattern.permute.xlu0 0
    %109 = vperm.xlu0 %108, %v67
    %v110 = vpop.permute.xlu0 %109
    %113 = vset.pattern.permute.xlu0 0
    %114 = vperm.xlu0 %113, %v68
    %v115 = vpop.permute.xlu0 %114
    %118 = vset.pattern.permute.xlu0 0
    %119 = vperm.xlu0 %118, %v69
    %v120 = vpop.permute.xlu0 %119
    %123 = vset.pattern.permute.xlu0 0
    %124 = vperm.xlu0 %123, %v70
    %v125 = vpop.permute.xlu0 %124
    %128 = vset.pattern.permute.xlu0 0
    %129 = vperm.xlu0 %128, %v71
    %v130 = vpop.permute.xlu0 %129
    %133 = vset.pattern.permute.xlu0 0
    %134 = vperm.xlu0 %133, %v72
    %v135 = vpop.permute.xlu0 %134
    %138 = vset.pattern.permute.xlu0 0
    %139 = vperm.xlu0 %138, %v73
    %v140 = vpop.permute.xlu0 %139
    %143 = vset.pattern.permute.xlu0 0
    %144 = vperm.xlu0 %143, %v74
    %v145 = vpop.permute.xlu0 %144
    %148 = vset.pattern.permute.xlu0 0
    %149 = vperm.xlu0 %148, %v75
    %v150 = vpop.permute.xlu0 %149
    %153 = vset.pattern.permute.xlu0 0
    %154 = vperm.xlu0 %153, %v76
    %v155 = vpop.permute.xlu0 %154
    %vm157 = vcmask 130048
    %v159 = vsel %vm157, %v45, 0
    %v162 = vsel %vm157, %v46, 0
    %v165 = vsel %vm157, %v47, 0
    %v168 = vsel %vm157, %v48, 0
    %v171 = vsel %vm157, %v49, 0
    %v174 = vsel %vm157, %v50, 0
    %v177 = vsel %vm157, %v51, 0
    %v180 = vsel %vm157, %v52, 0
    %v183 = vsel %vm157, %v53, 0
    %v186 = vsel %vm157, %v54, 0
    %v189 = vsel %vm157, %v55, 0
    %v192 = vsel %vm157, %v56, 0
    %v195 = vsel %vm157, %v57, 0
    %v198 = vsel %vm157, %v58, 0
    %v201 = vsel %vm157, %v59, 0
    %v204 = vsel %vm157, %v60, 0
    %v207 = vsel %vm157, %v29, 0
    %v210 = vsel %vm157, %v30, 0
    %v213 = vsel %vm157, %v31, 0
    %v216 = vsel %vm157, %v32, 0
    %v219 = vsel %vm157, %v33, 0
    %v222 = vsel %vm157, %v34, 0
    %v225 = vsel %vm157, %v35, 0
    %v228 = vsel %vm157, %v36, 0
    %v231 = vsel %vm157, %v37, 0
    %v234 = vsel %vm157, %v38, 0
    %v237 = vsel %vm157, %v39, 0
    %v240 = vsel %vm157, %v40, 0
    %v243 = vsel %vm157, %v41, 0
    %v246 = vsel %vm157, %v42, 0
    %v249 = vsel %vm157, %v43, 0
    %v252 = vsel %vm157, %v44, 0
    %254 = vmatprep.subr.mxu0 0.0
    %255 = vmatpush1.xpose.msra.mxu0 %v207
    %256 = vmatprep.subr.mxu0 0.0
    %257 = vmatpush1.xpose.msra.mxu0 %v210
    %258 = vmatprep.subr.mxu0 0.0
    %259 = vmatpush1.xpose.msra.mxu0 %v213
    %260 = vmatprep.subr.mxu0 0.0
    %261 = vmatpush1.xpose.msra.mxu0 %v216
    %262 = vmatprep.subr.mxu0 0.0
    %263 = vmatpush1.xpose.msra.mxu0 %v219
    %264 = vmatprep.subr.mxu0 0.0
    %265 = vmatpush1.xpose.msra.mxu0 %v222
    %266 = vmatprep.subr.mxu0 0.0
    %267 = vmatpush1.xpose.msra.mxu0 %v225
    %268 = vmatprep.subr.mxu0 0.0
    %269 = vmatpush1.xpose.msra.mxu0 %v228
    %270 = vmatprep.subr.mxu0 0.0
    %271 = vmatpush1.xpose.msra.mxu0 %v231
    %272 = vmatprep.subr.mxu0 0.0
    %273 = vmatpush1.xpose.msra.mxu0 %v234
    %274 = vmatprep.subr.mxu0 0.0
    %275 = vmatpush1.xpose.msra.mxu0 %v237
    %276 = vmatprep.subr.mxu0 0.0
    %277 = vmatpush1.xpose.msra.mxu0 %v240
    %278 = vmatprep.subr.mxu0 0.0
    %279 = vmatpush1.xpose.msra.mxu0 %v243
    %280 = vmatprep.subr.mxu0 0.0
    %281 = vmatpush1.xpose.msra.mxu0 %v246
    %282 = vmatprep.subr.mxu0 0.0
    %283 = vmatpush1.xpose.msra.mxu0 %v249
    %284 = vmatprep.subr.mxu0 0.0
    %285 = vmatpush1.xpose.msra.mxu0 %v252
    %286 = vmatprep.subr.mxu0 0.0
    %287 = vmatpush1.xpose.msra.mxu0 0.0
    %288 = vmatprep.subr.mxu0 0.0
    %289 = vmatpush1.xpose.msra.mxu0 0.0
    %290 = vmatprep.subr.mxu0 0.0
    %291 = vmatpush1.xpose.msra.mxu0 0.0
    %292 = vmatprep.subr.mxu0 0.0
    %293 = vmatpush1.xpose.msra.mxu0 0.0
    %294 = vmatprep.subr.mxu0 0.0
    %295 = vmatpush1.xpose.msra.mxu0 0.0
    %296 = vmatprep.subr.mxu0 0.0
    %297 = vmatpush1.xpose.msra.mxu0 0.0
    %298 = vmatprep.subr.mxu0 0.0
    %299 = vmatpush1.xpose.msra.mxu0 0.0
    %300 = vmatprep.subr.mxu0 0.0
    %301 = vmatpush1.xpose.msra.mxu0 0.0
    %302 = vmatprep.subr.mxu0 0.0
    %303 = vmatpush1.xpose.msra.mxu0 0.0
    %304 = vmatprep.subr.mxu0 0.0
    %305 = vmatpush1.xpose.msra.mxu0 0.0
    %306 = vmatprep.subr.mxu0 0.0
    %307 = vmatpush1.xpose.msra.mxu0 0.0
    %308 = vmatprep.subr.mxu0 0.0
    %309 = vmatpush1.xpose.msra.mxu0 0.0
    %310 = vmatprep.subr.mxu0 0.0
    %311 = vmatpush1.xpose.msra.mxu0 0.0
    %312 = vmatprep.subr.mxu0 0.0
    %313 = vmatpush1.xpose.msra.mxu0 0.0
    %314 = vmatprep.subr.mxu0 0.0
    %315 = vmatpush1.xpose.msra.mxu0 0.0
    %316 = vmatprep.subr.mxu0 0.0
    %317 = vmatpush1.xpose.msra.mxu0 0.0
    %318 = vmatprep.mubr.f32.mxu0 0.0
    %319 = vmatmul.mubr.f32.gmra.mrb[0].mxu0 %v159
    %v320 = vpop.f32.mrb[0].mxu0
    %v321 = vadd.f32 %v80, %v320
    %v322 = vpop.f32.mrb[0].mxu0
    %323 = vmatprep.mubr.f32.mxu0 0.0
    %324 = vmatmul.mubr.f32.gmra.mrb[0].mxu0 %v162
    %v325 = vpop.f32.mrb[0].mxu0
    %v326 = vadd.f32 %v85, %v325
    %v327 = vpop.f32.mrb[0].mxu0
    %328 = vmatprep.mubr.f32.mxu0 0.0
    %329 = vmatmul.mubr.f32.gmra.mrb[0].mxu0 %v165
    %v330 = vpop.f32.mrb[0].mxu0
    %v331 = vadd.f32 %v90, %v330
    %v332 = vpop.f32.mrb[0].mxu0
    %333 = vmatprep.mubr.f32.mxu0 0.0
    %334 = vmatmul.mubr.f32.gmra.mrb[0].mxu0 %v168
    %v335 = vpop.f32.mrb[0].mxu0
    %v336 = vadd.f32 %v95, %v335
    %v337 = vpop.f32.mrb[0].mxu0
    %338 = vmatprep.mubr.f32.mxu0 0.0
    %339 = vmatmul.mubr.f32.gmra.mrb[0].mxu0 %v171
    %v340 = vpop.f32.mrb[0].mxu0
    %v341 = vadd.f32 %v100, %v340
    %v342 = vpop.f32.mrb[0].mxu0
    %343 = vmatprep.mubr.f32.mxu0 0.0
    %344 = vmatmul.mubr.f32.gmra.mrb[0].mxu0 %v174
    %v345 = vpop.f32.mrb[0].mxu0
    %v346 = vadd.f32 %v105, %v345
    %v347 = vpop.f32.mrb[0].mxu0
    %348 = vmatprep.mubr.f32.mxu0 0.0
    %349 = vmatmul.mubr.f32.gmra.mrb[0].mxu0 %v177
    %v350 = vpop.f32.mrb[0].mxu0
    %v351 = vadd.f32 %v110, %v350
    %v352 = vpop.f32.mrb[0].mxu0
    %353 = vmatprep.mubr.f32.mxu0 0.0
    %354 = vmatmul.mubr.f32.gmra.mrb[0].mxu0 %v180
    %v355 = vpop.f32.mrb[0].mxu0
    %v356 = vadd.f32 %v115, %v355
    %v357 = vpop.f32.mrb[0].mxu0
    %358 = vmatprep.mubr.f32.mxu0 0.0
    %359 = vmatmul.mubr.f32.gmra.mrb[0].mxu0 %v183
    %v360 = vpop.f32.mrb[0].mxu0
    %v361 = vadd.f32 %v120, %v360
    %v362 = vpop.f32.mrb[0].mxu0
    %363 = vmatprep.mubr.f32.mxu0 0.0
    %364 = vmatmul.mubr.f32.gmra.mrb[0].mxu0 %v186
    %v365 = vpop.f32.mrb[0].mxu0
    %v366 = vadd.f32 %v125, %v365
    %v367 = vpop.f32.mrb[0].mxu0
    %368 = vmatprep.mubr.f32.mxu0 0.0
    %369 = vmatmul.mubr.f32.gmra.mrb[0].mxu0 %v189
    %v370 = vpop.f32.mrb[0].mxu0
    %v371 = vadd.f32 %v130, %v370
    %v372 = vpop.f32.mrb[0].mxu0
    %373 = vmatprep.mubr.f32.mxu0 0.0
    %374 = vmatmul.mubr.f32.gmra.mrb[0].mxu0 %v192
    %v375 = vpop.f32.mrb[0].mxu0
    %v376 = vadd.f32 %v135, %v375
    %v377 = vpop.f32.mrb[0].mxu0
    %378 = vmatprep.mubr.f32.mxu0 0.0
    %379 = vmatmul.mubr.f32.gmra.mrb[0].mxu0 %v195
    %v380 = vpop.f32.mrb[0].mxu0
    %v381 = vadd.f32 %v140, %v380
    %v382 = vpop.f32.mrb[0].mxu0
    %383 = vmatprep.mubr.f32.mxu0 0.0
    %384 = vmatmul.mubr.f32.gmra.mrb[0].mxu0 %v198
    %v385 = vpop.f32.mrb[0].mxu0
    %v386 = vadd.f32 %v145, %v385
    %v387 = vpop.f32.mrb[0].mxu0
    %388 = vmatprep.mubr.f32.mxu0 0.0
    %389 = vmatmul.mubr.f32.gmra.mrb[0].mxu0 %v201
    %v390 = vpop.f32.mrb[0].mxu0
    %v391 = vadd.f32 %v150, %v390
    %v392 = vpop.f32.mrb[0].mxu0
    %393 = vmatprep.mubr.f32.mxu0 0.0
    %394 = vmatmul.mubr.f32.gmra.mrb[0].mxu0 %v204
    %v395 = vpop.f32.mrb[0].mxu0
    %v396 = vadd.f32 %v155, %v395
    %v397 = vpop.f32.mrb[0].mxu0
    %398 = vdwg.mxu0
    %v399 = vmax.f32 %v321, 0.0
    %v400 = vmax.f32 %v326, 0.0
    %v401 = vmax.f32 %v331, 0.0
    %v402 = vmax.f32 %v336, 0.0
    %v403 = vmax.f32 %v341, 0.0
    %v404 = vmax.f32 %v346, 0.0
    %v405 = vmax.f32 %v351, 0.0
    %v406 = vmax.f32 %v356, 0.0
    %v407 = vmax.f32 %v361, 0.0
    %v408 = vmax.f32 %v366, 0.0
    %v409 = vmax.f32 %v371, 0.0
    %v410 = vmax.f32 %v376, 0.0
    %v411 = vmax.f32 %v381, 0.0
    %v412 = vmax.f32 %v386, 0.0
    %v413 = vmax.f32 %v391, 0.0
    %v414 = vmax.f32 %v396, 0.0
    %v415 = vld [vmem:[%s3] sm:$0xff]
    %v416 = vld [vmem:[%s4] sm:$0xff]
    %418 = vset.pattern.permute.xlu0 0
    %419 = vperm.xlu0 %418, %v416
    %v420 = vpop.permute.xlu0 %419
    %422 = vmatprep.subr.mxu0 0.0
    %423 = vmatpush1.msra.mxu0 %v399
    %424 = vmatprep.subr.mxu0 0.0
    %425 = vmatpush1.msra.mxu0 %v400
    %426 = vmatprep.subr.mxu0 0.0
    %427 = vmatpush1.msra.mxu0 %v401
    %428 = vmatprep.subr.mxu0 0.0
    %429 = vmatpush1.msra.mxu0 %v402
    %430 = vmatprep.subr.mxu0 0.0
    %431 = vmatpush1.msra.mxu0 %v403
    %432 = vmatprep.subr.mxu0 0.0
    %433 = vmatpush1.msra.mxu0 %v404
    %434 = vmatprep.subr.mxu0 0.0
    %435 = vmatpush1.msra.mxu0 %v405
    %436 = vmatprep.subr.mxu0 0.0
    %437 = vmatpush1.msra.mxu0 %v406
    %438 = vmatprep.subr.mxu0 0.0
    %439 = vmatpush1.msra.mxu0 %v407
    %440 = vmatprep.subr.mxu0 0.0
    %441 = vmatpush1.msra.mxu0 %v408
    %442 = vmatprep.subr.mxu0 0.0
    %443 = vmatpush1.msra.mxu0 %v409
    %444 = vmatprep.subr.mxu0 0.0
    %445 = vmatpush1.msra.mxu0 %v410
    %446 = vmatprep.subr.mxu0 0.0
    %447 = vmatpush1.msra.mxu0 %v411
    %448 = vmatprep.subr.mxu0 0.0
    %449 = vmatpush1.msra.mxu0 %v412
    %450 = vmatprep.subr.mxu0 0.0
    %451 = vmatpush1.msra.mxu0 %v413
    %452 = vmatprep.subr.mxu0 0.0
    %453 = vmatpush1.msra.mxu0 %v414
    %454 = vmatprep.subr.mxu0 0.0
    %455 = vmatpush1.msra.mxu0 0.0
    %456 = vmatprep.subr.mxu0 0.0
    %457 = vmatpush1.msra.mxu0 0.0
    %458 = vmatprep.subr.mxu0 0.0
    %459 = vmatpush1.msra.mxu0 0.0
    %460 = vmatprep.subr.mxu0 0.0
    %461 = vmatpush1.msra.mxu0 0.0
    %462 = vmatprep.subr.mxu0 0.0
    %463 = vmatpush1.msra.mxu0 0.0
    %464 = vmatprep.subr.mxu0 0.0
    %465 = vmatpush1.msra.mxu0 0.0
    %466 = vmatprep.subr.mxu0 0.0
    %467 = vmatpush1.msra.mxu0 0.0
    %468 = vmatprep.subr.mxu0 0.0
    %469 = vmatpush1.msra.mxu0 0.0
    %470 = vmatprep.subr.mxu0 0.0
    %471 = vmatpush1.msra.mxu0 0.0
    %472 = vmatprep.subr.mxu0 0.0
    %473 = vmatpush1.msra.mxu0 0.0
    %474 = vmatprep.subr.mxu0 0.0
    %475 = vmatpush1.msra.mxu0 0.0
    %476 = vmatprep.subr.mxu0 0.0
    %477 = vmatpush1.msra.mxu0 0.0
    %478 = vmatprep.subr.mxu0 0.0
    %479 = vmatpush1.msra.mxu0 0.0
    %480 = vmatprep.subr.mxu0 0.0
    %481 = vmatpush1.msra.mxu0 0.0
    %482 = vmatprep.subr.mxu0 0.0
    %483 = vmatpush1.msra.mxu0 0.0
    %484 = vmatprep.subr.mxu0 0.0
    %485 = vmatpush1.msra.mxu0 0.0
    %486 = vmatprep.mubr.f32.mxu0 0.0
    %487 = vmatmul.mubr.f32.gmra.mrb[0].mxu0 %v415
    %v488 = vpop.f32.mrb[0].mxu0
    %v489 = vadd.f32 %v420, %v488
    %v490 = vpop.f32.mrb[0].mxu0
    %491 = vdwg.mxu0
    %v492 = vxor.u32 %v489, 2147483648
    %v493 = vmul.f32 %v492, 1.442695
    %v494 = vpow.pop %v493
    %v495 = vadd.f32 %v494, 1.0
    %v496 = vrcp.pop %v495
    %v497 = vmul.f32 1.0, %v496
    %v498 = vld [vmem:[%s5] sm:$0xff]
    %500 = vset.pattern.permute.xlu0 0
    %501 = vperm.xlu0 %500, %v498
    %v502 = vpop.permute.xlu0 %501
    %v504 = vmul.f32 %v497, %v502
    %v505 = vrot.slane %v504, 4
    %v506 = vadd.f32 %v504, %v505
    %v507 = vrot.slane %v506, 2
    %v508 = vadd.f32 %v506, %v507
    %v509 = vrot.slane %v508, 1
    %v510 = vadd.f32 %v508, %v509
    %v511 = vld [vmem:[#allocation2] sm:$0x1]
    %513 = vset.pattern.permute.xlu0 0
    %514 = vperm.xlu0 %513, %v511
    %v515 = vpop.permute.xlu0 %514
    %v517 = vlaneseq
    %v518 = vshrl.u32 %v517, 7
    %v519 = vsub.s32 0, %v518
    %v520 = vrot.slane %v515, %v519
    %v521 = vadd.f32 %v510, %v520
    %v522 = vxor.u32 %v521, 2147483648
    %v523 = vmul.f32 %v522, 1.442695
    %v524 = vpow.pop %v523
    %v525 = vadd.f32 %v524, 1.0
    %v526 = vrcp.pop %v525
    %v527 = vmul.f32 1.0, %v526
    %528 = vst [vmem:[#allocation3] sm:$0x1] %v527
    // Predicated region
    $region30: #{tpu_custom_call.1} parent=1 // pred_check
      _
    $region31: #{tpu_custom_call.1} parent=1 // pred_check_branch
      %530 = sbr.rel (0) target = $region33
    $region32: #{tpu_custom_call.1} parent=1 // pred_region
      %s532 = ssub.s32 16, 16
      %533 = vsyncadd [#allocation4], %s532
      %s535 = sshll.u32 [#allocation3], 4
      %s536 = int_to_ptr.vmem [resolvable:$true] %s535
      %538 = dma.vmem_to_hbm [thread:$0]  %s536, 16, %s7, [#allocation4]
    $region33: #{tpu_custom_call.1} parent=1 // pred_fallthru
      _
    // Predicated region
    $region34: #{tpu_custom_call.1} parent=1 // pred_check
      _
    $region35: #{tpu_custom_call.1} parent=1 // pred_check_branch
      %540 = sbr.rel (0) target = $region37
    $region36: #{tpu_custom_call.1} parent=1 // pred_region
      %541 = dma.done [#allocation4], 16
    $region37: #{tpu_custom_call.1} parent=1 // pred_fallthru
      _
    %542 = vsyncpa [#allocation4], 1

</llo_original>
